<compile_context>
chip_gen: v5e
topology: v5e:2x2
jax: 0.10.0
libtpu: 0.0.40
codegen_flags: <defaults>
</compile_context>

<pallas_src>
import functools

import jax
import jax.numpy as jnp
from jax.experimental import pallas as pl
from jax.experimental.pallas import tpu as pltpu


C_PAD = 128   # lane-dense output slab width; sliced back to num_classes
SUB = 8       # f32 sublane height


def age_branch_kernel(x_ref, w1_ref, w2_ref, w3_ref, o_ref):
    # Whole MLP head fused: three MXU matmuls + ReLUs on one batch tile.
    # x arrives f32 from HBM; cast to bf16 in-kernel, accumulate in f32,
    # re-quantize intermediates to bf16 for the next MXU pass.
    x = x_ref[...].astype(jnp.bfloat16)
    h1 = jnp.dot(x, w1_ref[...], preferred_element_type=jnp.float32)
    h1 = jnp.maximum(h1, 0.0).astype(jnp.bfloat16)       # dropout(eval)=id, arelu1
    h2 = jnp.dot(h1, w2_ref[...], preferred_element_type=jnp.float32)
    h2 = jnp.maximum(h2, 0.0).astype(jnp.bfloat16)       # dropout(eval)=id, arelu2
    out = jnp.dot(h2, w3_ref[...], preferred_element_type=jnp.float32)
    o_ref[...] = out.astype(o_ref.dtype)


def prepare_weights(w1_t, w2_t, w3_t):
    """One-time (outside jit / per-model) weight prep.

    w*_t are transposed PyTorch Linear weights with shape (in, out).
    Returns bf16 weights; w3 is zero-padded to a 128-wide lane-dense slab.
    """
    nc = w3_t.shape[1]
    w1b = w1_t.astype(jnp.bfloat16)
    w2b = w2_t.astype(jnp.bfloat16)
    w3b = jnp.zeros((w3_t.shape[0], C_PAD), jnp.bfloat16)
    w3b = w3b.at[:, :nc].set(w3_t.astype(jnp.bfloat16))
    return w1b, w2b, w3b


def _round_up(v, m):
    return ((v + m - 1) // m) * m


def age_branch(x, w1b, w2b, w3b, *, num_classes, block_b=512):
    """x: (B, 512) f32; w1b/w2b/w3b: bf16 weights from prepare_weights().

    Returns f32 logits of shape (B, num_classes).
    """
    B, D = x.shape

    # Batch tile selection:
    #  * B <= 256: single tile (block dims equal full array dims); small-batch
    #    latency is weight-DMA bound, splitting only duplicates weight fetches.
    #  * B  > 256: at least 2 grid steps so ("parallel",) can use both v7x TCs,
    #    capped at block_b. Ragged tail tiles are masked by Pallas.
    if B <= 256:
        tb = B
    else:
        tb = min(block_b, _round_up(pl.cdiv(B, 2), SUB))
    grid = (pl.cdiv(B, tb),)

    # Advisory cost hint for the XLA scheduler.
    flops = 2 * B * (D * 512 + 512 * 256 + 256 * C_PAD)
    bytes_accessed = (
        x.size * 4 + w1b.size * 2 + w2b.size * 2 + w3b.size * 2 + B * C_PAD * 4
    )

    out = pl.pallas_call(
        age_branch_kernel,
        out_shape=jax.ShapeDtypeStruct((B, C_PAD), jnp.float32),
        grid=grid,
        in_specs=[
            # x tiles stream / double-buffer along the batch grid axis.
            pl.BlockSpec((tb, D), lambda i: (i, 0)),
            # Weights: constant block index -> fetched once, VMEM-resident.
            pl.BlockSpec(w1b.shape, lambda i: (0, 0)),
            pl.BlockSpec(w2b.shape, lambda i: (0, 0)),
            pl.BlockSpec(w3b.shape, lambda i: (0, 0)),
        ],
        out_specs=pl.BlockSpec((tb, C_PAD), lambda i: (i, 0)),
        compiler_params=pltpu.CompilerParams(
            dimension_semantics=("parallel",),   # dual-TC sharding on v7x
        ),
        cost_estimate=pl.CostEstimate(
            flops=flops, transcendentals=0, bytes_accessed=bytes_accessed),
    )(x, w1b, w2b, w3b)

    return out[:, :num_classes]


def reference(x, w1_t, w2_t, w3_t):
    # Matches kernel numerics: bf16 operands, f32 accumulation, bf16 intermediates.
    xb = x.astype(jnp.bfloat16)
    w1b = w1_t.astype(jnp.bfloat16)
    w2b = w2_t.astype(jnp.bfloat16)
    w3b = w3_t.astype(jnp.bfloat16)
    h1 = jnp.maximum(
        jnp.dot(xb, w1b, preferred_element_type=jnp.float32), 0.0
    ).astype(jnp.bfloat16)
    h2 = jnp.maximum(
        jnp.dot(h1, w2b, preferred_element_type=jnp.float32), 0.0
    ).astype(jnp.bfloat16)
    return jnp.dot(h2, w3b, preferred_element_type=jnp.float32)


if __name__ == "__main__":
    num_classes = 5
    B = 8  # small inference batch

    key = jax.random.PRNGKey(0)
    kx, k1, k2, k3 = jax.random.split(key, 4)

    x = jax.random.normal(kx, (B, 512), dtype=jnp.float32)

    # nn.Linear-style uniform(-1/sqrt(fan_in), +) init; stored transposed (in, out).
    def init_linear(k, fan_in, fan_out):
        bound = 1.0 / jnp.sqrt(fan_in)
        return jax.random.uniform(k, (fan_in, fan_out), jnp.float32, -bound, bound)

    w1_t = init_linear(k1, 512, 512)          # alinear1: 512 -> 512, bias=False
    w2_t = init_linear(k2, 512, 256)          # alinear2: 512 -> 256, bias=False
    w3_t = init_linear(k3, 256, num_classes)  # alinear3: 256 -> 5,  bias=False

    # One-time weight prep (outside the jitted per-call path).
    w1b, w2b, w3b = prepare_weights(w1_t, w2_t, w3_t)
    w1b, w2b, w3b = jax.block_until_ready((w1b, w2b, w3b))

    fwd = jax.jit(functools.partial(age_branch, num_classes=num_classes))
    out = fwd(x, w1b, w2b, w3b)
    out = jax.block_until_ready(out)

    ref = reference(x, w1_t, w2_t, w3_t)
    assert out.shape == (B, num_classes), out.shape
    err = float(jnp.max(jnp.abs(out - ref)))
    assert jnp.allclose(out, ref, atol=2e-2, rtol=2e-2), err

    print("KERNEL_OK")
</pallas_src>

<mosaic_0001>
module attributes {stable_mosaic.version = 11 : i64} {
  func.func @age_branch_kernel(%arg0: i32, %arg1: memref<8x512xf32, #tpu.memory_space<vmem>>, %arg2: memref<512x512xbf16, #tpu.memory_space<vmem>>, %arg3: memref<512x256xbf16, #tpu.memory_space<vmem>>, %arg4: memref<256x128xbf16, #tpu.memory_space<vmem>>, %arg5: memref<8x128xf32, #tpu.memory_space<vmem>>) attributes {dimension_semantics = [#tpu.dimension_semantics<parallel>], iteration_bounds = array<i64: 1>, scalar_prefetch = 0 : i64, scratch_operands = 0 : i64, tpu.core_type = #tpu.core_type<tc>, window_params = [{transform_indices = @transform_0, window_bounds = array<i64: 8, 512>}, {pipeline_mode = #tpu.pipeline_mode<synchronous>, transform_indices = @transform_1, window_bounds = array<i64: 512, 512>}, {pipeline_mode = #tpu.pipeline_mode<synchronous>, transform_indices = @transform_2, window_bounds = array<i64: 512, 256>}, {pipeline_mode = #tpu.pipeline_mode<synchronous>, transform_indices = @transform_3, window_bounds = array<i64: 256, 128>}, {transform_indices = @transform_4, window_bounds = array<i64: 8, 128>}]} {
    %c0 = arith.constant 0 : index
    %c0_0 = arith.constant 0 : index
    %0 = vector.load %arg1[%c0, %c0_0] : memref<8x512xf32, #tpu.memory_space<vmem>>, vector<8x512xf32>
    %1 = arith.truncf %0 : vector<8x512xf32> to vector<8x512xbf16>
    %c0_1 = arith.constant 0 : index
    %c0_2 = arith.constant 0 : index
    %2 = vector.load %arg2[%c0_1, %c0_2] : memref<512x512xbf16, #tpu.memory_space<vmem>>, vector<512x512xbf16>
    %cst = arith.constant dense<0.000000e+00> : vector<8x512xf32>
    %3 = tpu.matmul %1, %2, %cst {dimension_numbers = #tpu.dot_dimension_numbers<[1], [0], [0], [1], [0, 0, 1, 1], [], []>} : vector<8x512xbf16>, vector<512x512xbf16>, vector<8x512xf32> -> vector<8x512xf32>
    %cst_3 = arith.constant 0.000000e+00 : f32
    %4 = vector.broadcast %cst_3 : f32 to vector<8x512xf32>
    %5 = arith.maximumf %3, %4 : vector<8x512xf32>
    %6 = arith.truncf %5 : vector<8x512xf32> to vector<8x512xbf16>
    %c0_4 = arith.constant 0 : index
    %c0_5 = arith.constant 0 : index
    %7 = vector.load %arg3[%c0_4, %c0_5] : memref<512x256xbf16, #tpu.memory_space<vmem>>, vector<512x256xbf16>
    %cst_6 = arith.constant dense<0.000000e+00> : vector<8x256xf32>
    %8 = tpu.matmul %6, %7, %cst_6 {dimension_numbers = #tpu.dot_dimension_numbers<[1], [0], [0], [1], [0, 0, 1, 1], [], []>} : vector<8x512xbf16>, vector<512x256xbf16>, vector<8x256xf32> -> vector<8x256xf32>
    %cst_7 = arith.constant 0.000000e+00 : f32
    %9 = vector.broadcast %cst_7 : f32 to vector<8x256xf32>
    %10 = arith.maximumf %8, %9 : vector<8x256xf32>
    %11 = arith.truncf %10 : vector<8x256xf32> to vector<8x256xbf16>
    %c0_8 = arith.constant 0 : index
    %c0_9 = arith.constant 0 : index
    %12 = vector.load %arg4[%c0_8, %c0_9] : memref<256x128xbf16, #tpu.memory_space<vmem>>, vector<256x128xbf16>
    %cst_10 = arith.constant dense<0.000000e+00> : vector<8x128xf32>
    %13 = tpu.matmul %11, %12, %cst_10 {dimension_numbers = #tpu.dot_dimension_numbers<[1], [0], [0], [1], [0, 0, 1, 1], [], []>} : vector<8x256xbf16>, vector<256x128xbf16>, vector<8x128xf32> -> vector<8x128xf32>
    %c0_11 = arith.constant 0 : index
    %c0_12 = arith.constant 0 : index
    %14 = vector.load %arg5[%c0_11, %c0_12] : memref<8x128xf32, #tpu.memory_space<vmem>>, vector<8x128xf32>
    tpu.vector_store %arg5[%c0_11, %c0_12], %13 {strides = array<i32>} : memref<8x128xf32, #tpu.memory_space<vmem>>, vector<8x128xf32>,
    return
  }
  func.func @transform_0(%arg0: i32) -> (i32, i32) {
    %c0_i32 = arith.constant 0 : i32
    %c0_i32_0 = arith.constant 0 : i32
    return %arg0, %c0_i32 : i32, i32
  }
  func.func @transform_1(%arg0: i32) -> (i32, i32) {
    %c0_i32 = arith.constant 0 : i32
    %c0_i32_0 = arith.constant 0 : i32
    %c0_i32_1 = arith.constant 0 : i32
    return %c0_i32, %c0_i32_0 : i32, i32
  }
  func.func @transform_2(%arg0: i32) -> (i32, i32) {
    %c0_i32 = arith.constant 0 : i32
    %c0_i32_0 = arith.constant 0 : i32
    %c0_i32_1 = arith.constant 0 : i32
    return %c0_i32, %c0_i32_0 : i32, i32
  }
  func.func @transform_3(%arg0: i32) -> (i32, i32) {
    %c0_i32 = arith.constant 0 : i32
    %c0_i32_0 = arith.constant 0 : i32
    %c0_i32_1 = arith.constant 0 : i32
    return %c0_i32, %c0_i32_0 : i32, i32
  }
  func.func @transform_4(%arg0: i32) -> (i32, i32) {
    %c0_i32 = arith.constant 0 : i32
    %c0_i32_0 = arith.constant 0 : i32
    return %arg0, %c0_i32 : i32, i32
  }
}

</mosaic_0001>

<llo_original>
// kernel: age_branch.1
$region0: #{age_branch.1}
  #allocation0 [shape = 'u32[]', space=smem, size = 0x4, offset = 0x4, fixed_abs, tag = 'smem constant byte address 0x4 - core index']
  #allocation1 [shape = 'u32[72,128]{1,0:T(1,128)}', space=vmem, size = 0x9000, scoped, tag = 'internal scratch']
  %s0 = inlined_call_operand.hbm [shape: f32[8,512], index: 0, kind: input, shape index: {}]
  %s1 = inlined_call_operand.hbm [shape: bf16[512,512], index: 1, kind: input, shape index: {}]
  %s2 = inlined_call_operand.hbm [shape: bf16[512,256], index: 2, kind: input, shape index: {}]
  %s3 = inlined_call_operand.hbm [shape: bf16[256,128], index: 3, kind: input, shape index: {}]
  %s4 = inlined_call_operand.hbm [shape: f32[8,128], index: 4, kind: output, shape index: {}]
  %s5 = sld [smem:[#allocation0]]
  $region42: #{age_branch.1} parent=0
    _
  %s7 = ssub.s32 1, %s5
  %s8 = scalar_select 0, %s7, %s5
  $region1: #{age_branch.1} parent=0
    #allocation2 [shape = 'u8[16384]{0}', space=vmem, size = 0x4000, scoped, tag = 'input window, operand 0, single buffered']
    #allocation3 [shape = 's32[1]{0}', space=sflag, size = 0x4, scoped, tag = 'scoped memory for age_branch.1']
    #allocation4 [shape = 's32[1]{0}', space=sflag, size = 0x4, scoped, tag = 'scoped memory for age_branch.1']
    #allocation5 [shape = 'u8[524288]{0}', space=vmem, size = 0x80000, scoped, tag = 'input window, operand 1, single buffered']
    #allocation6 [shape = 's32[1]{0}', space=sflag, size = 0x4, scoped, tag = 'scoped memory for age_branch.1']
    #allocation7 [shape = 'u8[262144]{0}', space=vmem, size = 0x40000, scoped, tag = 'input window, operand 2, single buffered']
    #allocation8 [shape = 'u8[65536]{0}', space=vmem, size = 0x10000, scoped, tag = 'input window, operand 3, single buffered']
    #allocation9 [shape = 's32[1]{0}', space=sflag, size = 0x4, scoped, tag = 'scoped memory for age_branch.1']
    #allocation10 [shape = 'u8[4096]{0}', space=vmem, size = 0x1000, scoped, tag = 'output window, operand 0, single buffered']
    %9 = vsyncpa [#allocation3], 0
    %10 = vsyncpa [#allocation6], 0
    %11 = vsyncpa [#allocation9], 0
    %12 = vsyncpa [#allocation4], 0
    // Predicated region
    $region2: #{age_branch.1} parent=1 // pred_check
      _
    $region3: #{age_branch.1} parent=1 // pred_check_branch
      %14 = sbr.rel (0) target = $region5
    $region4: #{age_branch.1} parent=1 // pred_region
      %16 = vsyncadd [#allocation3], 0
      %s18 = sshll.u32 %s0, 4
      %s19 = int_to_ptr.hbm [resolvable:$true] %s18
      %s20 = sshll.u32 [#allocation2], 4
      %s21 = int_to_ptr.vmem [resolvable:$true] %s20
      %23 = dma.hbm_to_vmem [thread:$0]  %s19, 512, %s21, [#allocation3]
    $region5: #{age_branch.1} parent=1 // pred_fallthru
      _
    // Predicated region
    $region6: #{age_branch.1} parent=1 // pred_check
      _
    $region7: #{age_branch.1} parent=1 // pred_check_branch
      %25 = sbr.rel (0) target = $region9
    $region8: #{age_branch.1} parent=1 // pred_region
      %27 = vsyncadd [#allocation6], 0
      %s28 = sshll.u32 %s1, 4
      %s29 = int_to_ptr.hbm [resolvable:$true] %s28
      %s30 = sshll.u32 [#allocation5], 4
      %s31 = int_to_ptr.vmem [resolvable:$true] %s30
      %36 = dma.hbm_to_vmem [thread:$0]  %s29, 16384, %s31, [#allocation6], 256, 256, 16
    $region9: #{age_branch.1} parent=1 // pred_fallthru
      _
    // Predicated region
    $region10: #{age_branch.1} parent=1 // pred_check
      _
    $region11: #{age_branch.1} parent=1 // pred_check_branch
      %38 = sbr.rel (0) target = $region13
    $region12: #{age_branch.1} parent=1 // pred_region
      %40 = vsyncadd [#allocation6], 0
      %s41 = sshll.u32 %s2, 4
      %s42 = int_to_ptr.hbm [resolvable:$true] %s41
      %s43 = sshll.u32 [#allocation7], 4
      %s44 = int_to_ptr.vmem [resolvable:$true] %s43
      %49 = dma.hbm_to_vmem [thread:$0]  %s42, 8192, %s44, [#allocation6], 128, 128, 8
    $region13: #{age_branch.1} parent=1 // pred_fallthru
      _
    // Predicated region
    $region14: #{age_branch.1} parent=1 // pred_check
      _
    $region15: #{age_branch.1} parent=1 // pred_check_branch
      %51 = sbr.rel (0) target = $region17
    $region16: #{age_branch.1} parent=1 // pred_region
      %53 = vsyncadd [#allocation9], 0
      %s54 = sshll.u32 %s3, 4
      %s55 = int_to_ptr.hbm [resolvable:$true] %s54
      %s56 = sshll.u32 [#allocation8], 4
      %s57 = int_to_ptr.vmem [resolvable:$true] %s56
      %62 = dma.hbm_to_vmem [thread:$0]  %s55, 2048, %s57, [#allocation9], 64, 64, 4
    $region17: #{age_branch.1} parent=1 // pred_fallthru
      _
    // Predicated region
    $region18: #{age_branch.1} parent=1 // pred_check
      _
    $region19: #{age_branch.1} parent=1 // pred_check_branch
      %64 = sbr.rel (0) target = $region21
    $region20: #{age_branch.1} parent=1 // pred_region
      %66 = dma.done [#allocation3], 512
    $region21: #{age_branch.1} parent=1 // pred_fallthru
      _
    // Predicated region
    $region22: #{age_branch.1} parent=1 // pred_check
      _
    $region23: #{age_branch.1} parent=1 // pred_check_branch
      %68 = sbr.rel (0) target = $region25
    $region24: #{age_branch.1} parent=1 // pred_region
      %70 = dma.done [#allocation6], 16384
    $region25: #{age_branch.1} parent=1 // pred_fallthru
      _
    // Predicated region
    $region26: #{age_branch.1} parent=1 // pred_check
      _
    $region27: #{age_branch.1} parent=1 // pred_check_branch
      %72 = sbr.rel (0) target = $region29
    $region28: #{age_branch.1} parent=1 // pred_region
      %74 = dma.done [#allocation6], 8192
    $region29: #{age_branch.1} parent=1 // pred_fallthru
      _
    // Predicated region
    $region30: #{age_branch.1} parent=1 // pred_check
      _
    $region31: #{age_branch.1} parent=1 // pred_check_branch
      %76 = sbr.rel (0) target = $region33
    $region32: #{age_branch.1} parent=1 // pred_region
      %78 = dma.done [#allocation9], 2048
    $region33: #{age_branch.1} parent=1 // pred_fallthru
      _
    %v79 = vld [vmem:[#allocation2] sm:$0xff]
    %v80 = vld [vmem:[#allocation2 + $0x8] sm:$0xff]
    %v81 = vld [vmem:[#allocation2 + $0x10] sm:$0xff]
    %v82 = vld [vmem:[#allocation2 + $0x18] sm:$0xff]
    %v83 = vpack.c.bf16 %v79, %v79
    %v84 = vpack.c.bf16 %v80, %v80
    %v85 = vpack.c.bf16 %v81, %v81
    %v86 = vpack.c.bf16 %v82, %v82
    %v87 = vld [vmem:[#allocation5] sm:$0xff]
    %v88 = vld [vmem:[#allocation5 + $0x8] sm:$0xff]
    %v89 = vld [vmem:[#allocation5 + $0x10] sm:$0xff]
    %v90 = vld [vmem:[#allocation5 + $0x18] sm:$0xff]
    %v91 = vld [vmem:[#allocation5 + $0x20] sm:$0xff]
    %v92 = vld [vmem:[#allocation5 + $0x28] sm:$0xff]
    %v93 = vld [vmem:[#allocation5 + $0x30] sm:$0xff]
    %v94 = vld [vmem:[#allocation5 + $0x38] sm:$0xff]
    %v95 = vld [vmem:[#allocation5 + $0x40] sm:$0xff]
    %v96 = vld [vmem:[#allocation5 + $0x48] sm:$0xff]
    %v97 = vld [vmem:[#allocation5 + $0x50] sm:$0xff]
    %v98 = vld [vmem:[#allocation5 + $0x58] sm:$0xff]
    %v99 = vld [vmem:[#allocation5 + $0x60] sm:$0xff]
    %v100 = vld [vmem:[#allocation5 + $0x68] sm:$0xff]
    %v101 = vld [vmem:[#allocation5 + $0x70] sm:$0xff]
    %v102 = vld [vmem:[#allocation5 + $0x78] sm:$0xff]
    %v103 = vld [vmem:[#allocation5 + $0x80] sm:$0xff]
    %v104 = vld [vmem:[#allocation5 + $0x88] sm:$0xff]
    %v105 = vld [vmem:[#allocation5 + $0x90] sm:$0xff]
    %v106 = vld [vmem:[#allocation5 + $0x98] sm:$0xff]
    %v107 = vld [vmem:[#allocation5 + $0xa0] sm:$0xff]
    %v108 = vld [vmem:[#allocation5 + $0xa8] sm:$0xff]
    %v109 = vld [vmem:[#allocation5 + $0xb0] sm:$0xff]
    %v110 = vld [vmem:[#allocation5 + $0xb8] sm:$0xff]
    %v111 = vld [vmem:[#allocation5 + $0xc0] sm:$0xff]
    %v112 = vld [vmem:[#allocation5 + $0xc8] sm:$0xff]
    %v113 = vld [vmem:[#allocation5 + $0xd0] sm:$0xff]
    %v114 = vld [vmem:[#allocation5 + $0xd8] sm:$0xff]
    %v115 = vld [vmem:[#allocation5 + $0xe0] sm:$0xff]
    %v116 = vld [vmem:[#allocation5 + $0xe8] sm:$0xff]
    %v117 = vld [vmem:[#allocation5 + $0xf0] sm:$0xff]
    %v118 = vld [vmem:[#allocation5 + $0xf8] sm:$0xff]
    %v119 = vld [vmem:[#allocation5 + $0x100] sm:$0xff]
    %v120 = vld [vmem:[#allocation5 + $0x108] sm:$0xff]
    %v121 = vld [vmem:[#allocation5 + $0x110] sm:$0xff]
    %v122 = vld [vmem:[#allocation5 + $0x118] sm:$0xff]
    %v123 = vld [vmem:[#allocation5 + $0x120] sm:$0xff]
    %v124 = vld [vmem:[#allocation5 + $0x128] sm:$0xff]
    %v125 = vld [vmem:[#allocation5 + $0x130] sm:$0xff]
    %v126 = vld [vmem:[#allocation5 + $0x138] sm:$0xff]
    %v127 = vld [vmem:[#allocation5 + $0x140] sm:$0xff]
    %v128 = vld [vmem:[#allocation5 + $0x148] sm:$0xff]
    %v129 = vld [vmem:[#allocation5 + $0x150] sm:$0xff]
    %v130 = vld [vmem:[#allocation5 + $0x158] sm:$0xff]
    %v131 = vld [vmem:[#allocation5 + $0x160] sm:$0xff]
    %v132 = vld [vmem:[#allocation5 + $0x168] sm:$0xff]
    %v133 = vld [vmem:[#allocation5 + $0x170] sm:$0xff]
    %v134 = vld [vmem:[#allocation5 + $0x178] sm:$0xff]
    %v135 = vld [vmem:[#allocation5 + $0x180] sm:$0xff]
    %v136 = vld [vmem:[#allocation5 + $0x188] sm:$0xff]
    %v137 = vld [vmem:[#allocation5 + $0x190] sm:$0xff]
    %v138 = vld [vmem:[#allocation5 + $0x198] sm:$0xff]
    %v139 = vld [vmem:[#allocation5 + $0x1a0] sm:$0xff]
    %v140 = vld [vmem:[#allocation5 + $0x1a8] sm:$0xff]
    %v141 = vld [vmem:[#allocation5 + $0x1b0] sm:$0xff]
    %v142 = vld [vmem:[#allocation5 + $0x1b8] sm:$0xff]
    %v143 = vld [vmem:[#allocation5 + $0x1c0] sm:$0xff]
    %v144 = vld [vmem:[#allocation5 + $0x1c8] sm:$0xff]
    %v145 = vld [vmem:[#allocation5 + $0x1d0] sm:$0xff]
    %v146 = vld [vmem:[#allocation5 + $0x1d8] sm:$0xff]
    %v147 = vld [vmem:[#allocation5 + $0x1e0] sm:$0xff]
    %v148 = vld [vmem:[#allocation5 + $0x1e8] sm:$0xff]
    %v149 = vld [vmem:[#allocation5 + $0x1f0] sm:$0xff]
    %v150 = vld [vmem:[#allocation5 + $0x1f8] sm:$0xff]
    %v151 = vld [vmem:[#allocation5 + $0x200] sm:$0xff]
    %v152 = vld [vmem:[#allocation5 + $0x208] sm:$0xff]
    %v153 = vld [vmem:[#allocation5 + $0x210] sm:$0xff]
    %v154 = vld [vmem:[#allocation5 + $0x218] sm:$0xff]
    %v155 = vld [vmem:[#allocation5 + $0x220] sm:$0xff]
    %v156 = vld [vmem:[#allocation5 + $0x228] sm:$0xff]
    %v157 = vld [vmem:[#allocation5 + $0x230] sm:$0xff]
    %v158 = vld [vmem:[#allocation5 + $0x238] sm:$0xff]
    %v159 = vld [vmem:[#allocation5 + $0x240] sm:$0xff]
    %v160 = vld [vmem:[#allocation5 + $0x248] sm:$0xff]
    %v161 = vld [vmem:[#allocation5 + $0x250] sm:$0xff]
    %v162 = vld [vmem:[#allocation5 + $0x258] sm:$0xff]
    %v163 = vld [vmem:[#allocation5 + $0x260] sm:$0xff]
    %v164 = vld [vmem:[#allocation5 + $0x268] sm:$0xff]
    %v165 = vld [vmem:[#allocation5 + $0x270] sm:$0xff]
    %v166 = vld [vmem:[#allocation5 + $0x278] sm:$0xff]
    %v167 = vld [vmem:[#allocation5 + $0x280] sm:$0xff]
    %v168 = vld [vmem:[#allocation5 + $0x288] sm:$0xff]
    %v169 = vld [vmem:[#allocation5 + $0x290] sm:$0xff]
    %v170 = vld [vmem:[#allocation5 + $0x298] sm:$0xff]
    %v171 = vld [vmem:[#allocation5 + $0x2a0] sm:$0xff]
    %v172 = vld [vmem:[#allocation5 + $0x2a8] sm:$0xff]
    %v173 = vld [vmem:[#allocation5 + $0x2b0] sm:$0xff]
    %v174 = vld [vmem:[#allocation5 + $0x2b8] sm:$0xff]
    %v175 = vld [vmem:[#allocation5 + $0x2c0] sm:$0xff]
    %v176 = vld [vmem:[#allocation5 + $0x2c8] sm:$0xff]
    %v177 = vld [vmem:[#allocation5 + $0x2d0] sm:$0xff]
    %v178 = vld [vmem:[#allocation5 + $0x2d8] sm:$0xff]
    %v179 = vld [vmem:[#allocation5 + $0x2e0] sm:$0xff]
    %v180 = vld [vmem:[#allocation5 + $0x2e8] sm:$0xff]
    %v181 = vld [vmem:[#allocation5 + $0x2f0] sm:$0xff]
    %v182 = vld [vmem:[#allocation5 + $0x2f8] sm:$0xff]
    %v183 = vld [vmem:[#allocation5 + $0x300] sm:$0xff]
    %v184 = vld [vmem:[#allocation5 + $0x308] sm:$0xff]
    %v185 = vld [vmem:[#allocation5 + $0x310] sm:$0xff]
    %v186 = vld [vmem:[#allocation5 + $0x318] sm:$0xff]
    %v187 = vld [vmem:[#allocation5 + $0x320] sm:$0xff]
    %v188 = vld [vmem:[#allocation5 + $0x328] sm:$0xff]
    %v189 = vld [vmem:[#allocation5 + $0x330] sm:$0xff]
    %v190 = vld [vmem:[#allocation5 + $0x338] sm:$0xff]
    %v191 = vld [vmem:[#allocation5 + $0x340] sm:$0xff]
    %v192 = vld [vmem:[#allocation5 + $0x348] sm:$0xff]
    %v193 = vld [vmem:[#allocation5 + $0x350] sm:$0xff]
    %v194 = vld [vmem:[#allocation5 + $0x358] sm:$0xff]
    %v195 = vld [vmem:[#allocation5 + $0x360] sm:$0xff]
    %v196 = vld [vmem:[#allocation5 + $0x368] sm:$0xff]
    %v197 = vld [vmem:[#allocation5 + $0x370] sm:$0xff]
    %v198 = vld [vmem:[#allocation5 + $0x378] sm:$0xff]
    %v199 = vld [vmem:[#allocation5 + $0x380] sm:$0xff]
    %v200 = vld [vmem:[#allocation5 + $0x388] sm:$0xff]
    %v201 = vld [vmem:[#allocation5 + $0x390] sm:$0xff]
    %v202 = vld [vmem:[#allocation5 + $0x398] sm:$0xff]
    %v203 = vld [vmem:[#allocation5 + $0x3a0] sm:$0xff]
    %v204 = vld [vmem:[#allocation5 + $0x3a8] sm:$0xff]
    %v205 = vld [vmem:[#allocation5 + $0x3b0] sm:$0xff]
    %v206 = vld [vmem:[#allocation5 + $0x3b8] sm:$0xff]
    %v207 = vld [vmem:[#allocation5 + $0x3c0] sm:$0xff]
    %v208 = vld [vmem:[#allocation5 + $0x3c8] sm:$0xff]
    %v209 = vld [vmem:[#allocation5 + $0x3d0] sm:$0xff]
    %v210 = vld [vmem:[#allocation5 + $0x3d8] sm:$0xff]
    %v211 = vld [vmem:[#allocation5 + $0x3e0] sm:$0xff]
    %v212 = vld [vmem:[#allocation5 + $0x3e8] sm:$0xff]
    %v213 = vld [vmem:[#allocation5 + $0x3f0] sm:$0xff]
    %v214 = vld [vmem:[#allocation5 + $0x3f8] sm:$0xff]
    %v343 = vunpack.c.l.b16 %v87
    %v344 = vunpack.c.h.b16 %v87
    %v345 = vunpack.c.l.b16 %v88
    %v346 = vunpack.c.h.b16 %v88
    %v347 = vunpack.c.l.b16 %v89
    %v348 = vunpack.c.h.b16 %v89
    %v349 = vunpack.c.l.b16 %v90
    %v350 = vunpack.c.h.b16 %v90
    %v351 = vunpack.c.l.b16 %v91
    %v352 = vunpack.c.h.b16 %v91
    %v353 = vunpack.c.l.b16 %v92
    %v354 = vunpack.c.h.b16 %v92
    %v355 = vunpack.c.l.b16 %v93
    %v356 = vunpack.c.h.b16 %v93
    %v357 = vunpack.c.l.b16 %v94
    %v358 = vunpack.c.h.b16 %v94
    %v359 = vunpack.c.l.b16 %v95
    %v360 = vunpack.c.h.b16 %v95
    %v361 = vunpack.c.l.b16 %v96
    %v362 = vunpack.c.h.b16 %v96
    %v363 = vunpack.c.l.b16 %v97
    %v364 = vunpack.c.h.b16 %v97
    %v365 = vunpack.c.l.b16 %v98
    %v366 = vunpack.c.h.b16 %v98
    %v367 = vunpack.c.l.b16 %v99
    %v368 = vunpack.c.h.b16 %v99
    %v369 = vunpack.c.l.b16 %v100
    %v370 = vunpack.c.h.b16 %v100
    %v371 = vunpack.c.l.b16 %v101
    %v372 = vunpack.c.h.b16 %v101
    %v373 = vunpack.c.l.b16 %v102
    %v374 = vunpack.c.h.b16 %v102
    %v375 = vunpack.c.l.b16 %v103
    %v376 = vunpack.c.h.b16 %v103
    %v377 = vunpack.c.l.b16 %v104
    %v378 = vunpack.c.h.b16 %v104
    %v379 = vunpack.c.l.b16 %v105
    %v380 = vunpack.c.h.b16 %v105
    %v381 = vunpack.c.l.b16 %v106
    %v382 = vunpack.c.h.b16 %v106
    %v383 = vunpack.c.l.b16 %v107
    %v384 = vunpack.c.h.b16 %v107
    %v385 = vunpack.c.l.b16 %v108
    %v386 = vunpack.c.h.b16 %v108
    %v387 = vunpack.c.l.b16 %v109
    %v388 = vunpack.c.h.b16 %v109
    %v389 = vunpack.c.l.b16 %v110
    %v390 = vunpack.c.h.b16 %v110
    %v391 = vunpack.c.l.b16 %v111
    %v392 = vunpack.c.h.b16 %v111
    %v393 = vunpack.c.l.b16 %v112
    %v394 = vunpack.c.h.b16 %v112
    %v395 = vunpack.c.l.b16 %v113
    %v396 = vunpack.c.h.b16 %v113
    %v397 = vunpack.c.l.b16 %v114
    %v398 = vunpack.c.h.b16 %v114
    %v399 = vunpack.c.l.b16 %v115
    %v400 = vunpack.c.h.b16 %v115
    %v401 = vunpack.c.l.b16 %v116
    %v402 = vunpack.c.h.b16 %v116
    %v403 = vunpack.c.l.b16 %v117
    %v404 = vunpack.c.h.b16 %v117
    %v405 = vunpack.c.l.b16 %v118
    %v406 = vunpack.c.h.b16 %v118
    %v407 = vunpack.c.l.b16 %v119
    %v408 = vunpack.c.h.b16 %v119
    %v409 = vunpack.c.l.b16 %v120
    %v410 = vunpack.c.h.b16 %v120
    %v411 = vunpack.c.l.b16 %v121
    %v412 = vunpack.c.h.b16 %v121
    %v413 = vunpack.c.l.b16 %v122
    %v414 = vunpack.c.h.b16 %v122
    %v415 = vunpack.c.l.b16 %v123
    %v416 = vunpack.c.h.b16 %v123
    %v417 = vunpack.c.l.b16 %v124
    %v418 = vunpack.c.h.b16 %v124
    %v419 = vunpack.c.l.b16 %v125
    %v420 = vunpack.c.h.b16 %v125
    %v421 = vunpack.c.l.b16 %v126
    %v422 = vunpack.c.h.b16 %v126
    %v423 = vunpack.c.l.b16 %v127
    %v424 = vunpack.c.h.b16 %v127
    %v425 = vunpack.c.l.b16 %v128
    %v426 = vunpack.c.h.b16 %v128
    %v427 = vunpack.c.l.b16 %v129
    %v428 = vunpack.c.h.b16 %v129
    %v429 = vunpack.c.l.b16 %v130
    %v430 = vunpack.c.h.b16 %v130
    %v431 = vunpack.c.l.b16 %v131
    %v432 = vunpack.c.h.b16 %v131
    %v433 = vunpack.c.l.b16 %v132
    %v434 = vunpack.c.h.b16 %v132
    %v435 = vunpack.c.l.b16 %v133
    %v436 = vunpack.c.h.b16 %v133
    %v437 = vunpack.c.l.b16 %v134
    %v438 = vunpack.c.h.b16 %v134
    %v439 = vunpack.c.l.b16 %v135
    %v440 = vunpack.c.h.b16 %v135
    %v441 = vunpack.c.l.b16 %v136
    %v442 = vunpack.c.h.b16 %v136
    %v443 = vunpack.c.l.b16 %v137
    %v444 = vunpack.c.h.b16 %v137
    %v445 = vunpack.c.l.b16 %v138
    %v446 = vunpack.c.h.b16 %v138
    %v447 = vunpack.c.l.b16 %v139
    %v448 = vunpack.c.h.b16 %v139
    %v449 = vunpack.c.l.b16 %v140
    %v450 = vunpack.c.h.b16 %v140
    %v451 = vunpack.c.l.b16 %v141
    %v452 = vunpack.c.h.b16 %v141
    %v453 = vunpack.c.l.b16 %v142
    %v454 = vunpack.c.h.b16 %v142
    %v455 = vunpack.c.l.b16 %v143
    %v456 = vunpack.c.h.b16 %v143
    %v457 = vunpack.c.l.b16 %v144
    %v458 = vunpack.c.h.b16 %v144
    %v459 = vunpack.c.l.b16 %v145
    %v460 = vunpack.c.h.b16 %v145
    %v461 = vunpack.c.l.b16 %v146
    %v462 = vunpack.c.h.b16 %v146
    %v463 = vunpack.c.l.b16 %v147
    %v464 = vunpack.c.h.b16 %v147
    %v465 = vunpack.c.l.b16 %v148
    %v466 = vunpack.c.h.b16 %v148
    %v467 = vunpack.c.l.b16 %v149
    %v468 = vunpack.c.h.b16 %v149
    %v469 = vunpack.c.l.b16 %v150
    %v470 = vunpack.c.h.b16 %v150
    %v471 = vunpack.c.l.b16 %v151
    %v472 = vunpack.c.h.b16 %v151
    %v473 = vunpack.c.l.b16 %v152
    %v474 = vunpack.c.h.b16 %v152
    %v475 = vunpack.c.l.b16 %v153
    %v476 = vunpack.c.h.b16 %v153
    %v477 = vunpack.c.l.b16 %v154
    %v478 = vunpack.c.h.b16 %v154
    %v479 = vunpack.c.l.b16 %v155
    %v480 = vunpack.c.h.b16 %v155
    %v481 = vunpack.c.l.b16 %v156
    %v482 = vunpack.c.h.b16 %v156
    %v483 = vunpack.c.l.b16 %v157
    %v484 = vunpack.c.h.b16 %v157
    %v485 = vunpack.c.l.b16 %v158
    %v486 = vunpack.c.h.b16 %v158
    %v487 = vunpack.c.l.b16 %v159
    %v488 = vunpack.c.h.b16 %v159
    %v489 = vunpack.c.l.b16 %v160
    %v490 = vunpack.c.h.b16 %v160
    %v491 = vunpack.c.l.b16 %v161
    %v492 = vunpack.c.h.b16 %v161
    %v493 = vunpack.c.l.b16 %v162
    %v494 = vunpack.c.h.b16 %v162
    %v495 = vunpack.c.l.b16 %v163
    %v496 = vunpack.c.h.b16 %v163
    %v497 = vunpack.c.l.b16 %v164
    %v498 = vunpack.c.h.b16 %v164
    %v499 = vunpack.c.l.b16 %v165
    %v500 = vunpack.c.h.b16 %v165
    %v501 = vunpack.c.l.b16 %v166
    %v502 = vunpack.c.h.b16 %v166
    %v503 = vunpack.c.l.b16 %v167
    %v504 = vunpack.c.h.b16 %v167
    %v505 = vunpack.c.l.b16 %v168
    %v506 = vunpack.c.h.b16 %v168
    %v507 = vunpack.c.l.b16 %v169
    %v508 = vunpack.c.h.b16 %v169
    %v509 = vunpack.c.l.b16 %v170
    %v510 = vunpack.c.h.b16 %v170
    %v511 = vunpack.c.l.b16 %v171
    %v512 = vunpack.c.h.b16 %v171
    %v513 = vunpack.c.l.b16 %v172
    %v514 = vunpack.c.h.b16 %v172
    %v515 = vunpack.c.l.b16 %v173
    %v516 = vunpack.c.h.b16 %v173
    %v517 = vunpack.c.l.b16 %v174
    %v518 = vunpack.c.h.b16 %v174
    %v519 = vunpack.c.l.b16 %v175
    %v520 = vunpack.c.h.b16 %v175
    %v521 = vunpack.c.l.b16 %v176
    %v522 = vunpack.c.h.b16 %v176
    %v523 = vunpack.c.l.b16 %v177
    %v524 = vunpack.c.h.b16 %v177
    %v525 = vunpack.c.l.b16 %v178
    %v526 = vunpack.c.h.b16 %v178
    %v527 = vunpack.c.l.b16 %v179
    %v528 = vunpack.c.h.b16 %v179
    %v529 = vunpack.c.l.b16 %v180
    %v530 = vunpack.c.h.b16 %v180
    %v531 = vunpack.c.l.b16 %v181
    %v532 = vunpack.c.h.b16 %v181
    %v533 = vunpack.c.l.b16 %v182
    %v534 = vunpack.c.h.b16 %v182
    %v535 = vunpack.c.l.b16 %v183
    %v536 = vunpack.c.h.b16 %v183
    %v537 = vunpack.c.l.b16 %v184
    %v538 = vunpack.c.h.b16 %v184
    %v539 = vunpack.c.l.b16 %v185
    %v540 = vunpack.c.h.b16 %v185
    %v541 = vunpack.c.l.b16 %v186
    %v542 = vunpack.c.h.b16 %v186
    %v543 = vunpack.c.l.b16 %v187
    %v544 = vunpack.c.h.b16 %v187
    %v545 = vunpack.c.l.b16 %v188
    %v546 = vunpack.c.h.b16 %v188
    %v547 = vunpack.c.l.b16 %v189
    %v548 = vunpack.c.h.b16 %v189
    %v549 = vunpack.c.l.b16 %v190
    %v550 = vunpack.c.h.b16 %v190
    %v551 = vunpack.c.l.b16 %v191
    %v552 = vunpack.c.h.b16 %v191
    %v553 = vunpack.c.l.b16 %v192
    %v554 = vunpack.c.h.b16 %v192
    %v555 = vunpack.c.l.b16 %v193
    %v556 = vunpack.c.h.b16 %v193
    %v557 = vunpack.c.l.b16 %v194
    %v558 = vunpack.c.h.b16 %v194
    %v559 = vunpack.c.l.b16 %v195
    %v560 = vunpack.c.h.b16 %v195
    %v561 = vunpack.c.l.b16 %v196
    %v562 = vunpack.c.h.b16 %v196
    %v563 = vunpack.c.l.b16 %v197
    %v564 = vunpack.c.h.b16 %v197
    %v565 = vunpack.c.l.b16 %v198
    %v566 = vunpack.c.h.b16 %v198
    %v567 = vunpack.c.l.b16 %v199
    %v568 = vunpack.c.h.b16 %v199
    %v569 = vunpack.c.l.b16 %v200
    %v570 = vunpack.c.h.b16 %v200
    %v571 = vunpack.c.l.b16 %v201
    %v572 = vunpack.c.h.b16 %v201
    %v573 = vunpack.c.l.b16 %v202
    %v574 = vunpack.c.h.b16 %v202
    %v575 = vunpack.c.l.b16 %v203
    %v576 = vunpack.c.h.b16 %v203
    %v577 = vunpack.c.l.b16 %v204
    %v578 = vunpack.c.h.b16 %v204
    %v579 = vunpack.c.l.b16 %v205
    %v580 = vunpack.c.h.b16 %v205
    %v581 = vunpack.c.l.b16 %v206
    %v582 = vunpack.c.h.b16 %v206
    %v583 = vunpack.c.l.b16 %v207
    %v584 = vunpack.c.h.b16 %v207
    %v585 = vunpack.c.l.b16 %v208
    %v586 = vunpack.c.h.b16 %v208
    %v587 = vunpack.c.l.b16 %v209
    %v588 = vunpack.c.h.b16 %v209
    %v589 = vunpack.c.l.b16 %v210
    %v590 = vunpack.c.h.b16 %v210
    %v591 = vunpack.c.l.b16 %v211
    %v592 = vunpack.c.h.b16 %v211
    %v593 = vunpack.c.l.b16 %v212
    %v594 = vunpack.c.h.b16 %v212
    %v595 = vunpack.c.l.b16 %v213
    %v596 = vunpack.c.h.b16 %v213
    %v597 = vunpack.c.l.b16 %v214
    %v598 = vunpack.c.h.b16 %v214
    %v599 = vpack.c.b16 %v347, %v343
    %v600 = vpack.c.b16 %v348, %v344
    %v601 = vpack.c.b16 %v349, %v345
    %v602 = vpack.c.b16 %v350, %v346
    %v603 = vpack.c.b16 %v355, %v351
    %v604 = vpack.c.b16 %v356, %v352
    %v605 = vpack.c.b16 %v357, %v353
    %v606 = vpack.c.b16 %v358, %v354
    %v607 = vpack.c.b16 %v363, %v359
    %v608 = vpack.c.b16 %v364, %v360
    %v609 = vpack.c.b16 %v365, %v361
    %v610 = vpack.c.b16 %v366, %v362
    %v611 = vpack.c.b16 %v371, %v367
    %v612 = vpack.c.b16 %v372, %v368
    %v613 = vpack.c.b16 %v373, %v369
    %v614 = vpack.c.b16 %v374, %v370
    %v615 = vpack.c.b16 %v379, %v375
    %v616 = vpack.c.b16 %v380, %v376
    %v617 = vpack.c.b16 %v381, %v377
    %v618 = vpack.c.b16 %v382, %v378
    %v619 = vpack.c.b16 %v387, %v383
    %v620 = vpack.c.b16 %v388, %v384
    %v621 = vpack.c.b16 %v389, %v385
    %v622 = vpack.c.b16 %v390, %v386
    %v623 = vpack.c.b16 %v395, %v391
    %v624 = vpack.c.b16 %v396, %v392
    %v625 = vpack.c.b16 %v397, %v393
    %v626 = vpack.c.b16 %v398, %v394
    %v627 = vpack.c.b16 %v403, %v399
    %v628 = vpack.c.b16 %v404, %v400
    %v629 = vpack.c.b16 %v405, %v401
    %v630 = vpack.c.b16 %v406, %v402
    %v631 = vpack.c.b16 %v411, %v407
    %v632 = vpack.c.b16 %v412, %v408
    %v633 = vpack.c.b16 %v413, %v409
    %v634 = vpack.c.b16 %v414, %v410
    %v635 = vpack.c.b16 %v419, %v415
    %v636 = vpack.c.b16 %v420, %v416
    %v637 = vpack.c.b16 %v421, %v417
    %v638 = vpack.c.b16 %v422, %v418
    %v639 = vpack.c.b16 %v427, %v423
    %v640 = vpack.c.b16 %v428, %v424
    %v641 = vpack.c.b16 %v429, %v425
    %v642 = vpack.c.b16 %v430, %v426
    %v643 = vpack.c.b16 %v435, %v431
    %v644 = vpack.c.b16 %v436, %v432
    %v645 = vpack.c.b16 %v437, %v433
    %v646 = vpack.c.b16 %v438, %v434
    %v647 = vpack.c.b16 %v443, %v439
    %v648 = vpack.c.b16 %v444, %v440
    %v649 = vpack.c.b16 %v445, %v441
    %v650 = vpack.c.b16 %v446, %v442
    %v651 = vpack.c.b16 %v451, %v447
    %v652 = vpack.c.b16 %v452, %v448
    %v653 = vpack.c.b16 %v453, %v449
    %v654 = vpack.c.b16 %v454, %v450
    %v655 = vpack.c.b16 %v459, %v455
    %v656 = vpack.c.b16 %v460, %v456
    %v657 = vpack.c.b16 %v461, %v457
    %v658 = vpack.c.b16 %v462, %v458
    %v659 = vpack.c.b16 %v467, %v463
    %v660 = vpack.c.b16 %v468, %v464
    %v661 = vpack.c.b16 %v469, %v465
    %v662 = vpack.c.b16 %v470, %v466
    %v663 = vpack.c.b16 %v475, %v471
    %v664 = vpack.c.b16 %v476, %v472
    %v665 = vpack.c.b16 %v477, %v473
    %v666 = vpack.c.b16 %v478, %v474
    %v667 = vpack.c.b16 %v483, %v479
    %v668 = vpack.c.b16 %v484, %v480
    %v669 = vpack.c.b16 %v485, %v481
    %v670 = vpack.c.b16 %v486, %v482
    %v671 = vpack.c.b16 %v491, %v487
    %v672 = vpack.c.b16 %v492, %v488
    %v673 = vpack.c.b16 %v493, %v489
    %v674 = vpack.c.b16 %v494, %v490
    %v675 = vpack.c.b16 %v499, %v495
    %v676 = vpack.c.b16 %v500, %v496
    %v677 = vpack.c.b16 %v501, %v497
    %v678 = vpack.c.b16 %v502, %v498
    %v679 = vpack.c.b16 %v507, %v503
    %v680 = vpack.c.b16 %v508, %v504
    %v681 = vpack.c.b16 %v509, %v505
    %v682 = vpack.c.b16 %v510, %v506
    %v683 = vpack.c.b16 %v515, %v511
    %v684 = vpack.c.b16 %v516, %v512
    %v685 = vpack.c.b16 %v517, %v513
    %v686 = vpack.c.b16 %v518, %v514
    %v687 = vpack.c.b16 %v523, %v519
    %v688 = vpack.c.b16 %v524, %v520
    %v689 = vpack.c.b16 %v525, %v521
    %v690 = vpack.c.b16 %v526, %v522
    %v691 = vpack.c.b16 %v531, %v527
    %v692 = vpack.c.b16 %v532, %v528
    %v693 = vpack.c.b16 %v533, %v529
    %v694 = vpack.c.b16 %v534, %v530
    %v695 = vpack.c.b16 %v539, %v535
    %v696 = vpack.c.b16 %v540, %v536
    %v697 = vpack.c.b16 %v541, %v537
    %v698 = vpack.c.b16 %v542, %v538
    %v699 = vpack.c.b16 %v547, %v543
    %v700 = vpack.c.b16 %v548, %v544
    %v701 = vpack.c.b16 %v549, %v545
    %v702 = vpack.c.b16 %v550, %v546
    %v703 = vpack.c.b16 %v555, %v551
    %v704 = vpack.c.b16 %v556, %v552
    %v705 = vpack.c.b16 %v557, %v553
    %v706 = vpack.c.b16 %v558, %v554
    %v707 = vpack.c.b16 %v563, %v559
    %v708 = vpack.c.b16 %v564, %v560
    %v709 = vpack.c.b16 %v565, %v561
    %v710 = vpack.c.b16 %v566, %v562
    %v711 = vpack.c.b16 %v571, %v567
    %v712 = vpack.c.b16 %v572, %v568
    %v713 = vpack.c.b16 %v573, %v569
    %v714 = vpack.c.b16 %v574, %v570
    %v715 = vpack.c.b16 %v579, %v575
    %v716 = vpack.c.b16 %v580, %v576
    %v717 = vpack.c.b16 %v581, %v577
    %v718 = vpack.c.b16 %v582, %v578
    %v719 = vpack.c.b16 %v587, %v583
    %v720 = vpack.c.b16 %v588, %v584
    %v721 = vpack.c.b16 %v589, %v585
    %v722 = vpack.c.b16 %v590, %v586
    %v723 = vpack.c.b16 %v595, %v591
    %v724 = vpack.c.b16 %v596, %v592
    %v725 = vpack.c.b16 %v597, %v593
    %v726 = vpack.c.b16 %v598, %v594
    %855 = vmatpush.bf16.msra.mxu0 %v627
    %856 = vmatpush.bf16.msra.mxu0 %v623
    %857 = vmatpush.bf16.msra.mxu0 %v619
    %858 = vmatpush.bf16.msra.mxu0 %v615
    %859 = vmatpush.bf16.msra.mxu0 %v611
    %860 = vmatpush.bf16.msra.mxu0 %v607
    %861 = vmatpush.bf16.msra.mxu0 %v603
    %862 = vmatpush.bf16.msra.mxu0 %v599
    %863 = vmatmul.bf16.gmra.mxu0 %v83
    %v864 = vpop.f32.mrf.mxu0
    %v865 = vadd.f32 0.0, %v864
    %v866 = vpop.f32.mrf.mxu0
    %867 = vdwg.mxu0
    %868 = vmatpush.bf16.msra.mxu0 %v659
    %869 = vmatpush.bf16.msra.mxu0 %v655
    %870 = vmatpush.bf16.msra.mxu0 %v651
    %871 = vmatpush.bf16.msra.mxu0 %v647
    %872 = vmatpush.bf16.msra.mxu0 %v643
    %873 = vmatpush.bf16.msra.mxu0 %v639
    %874 = vmatpush.bf16.msra.mxu0 %v635
    %875 = vmatpush.bf16.msra.mxu0 %v631
    %876 = vmatmul.bf16.gmra.mxu0 %v84
    %v877 = vpop.f32.mrf.mxu0
    %v878 = vadd.f32 %v865, %v877
    %v879 = vpop.f32.mrf.mxu0
    %880 = vdwg.mxu0
    %881 = vmatpush.bf16.msra.mxu0 %v691
    %882 = vmatpush.bf16.msra.mxu0 %v687
    %883 = vmatpush.bf16.msra.mxu0 %v683
    %884 = vmatpush.bf16.msra.mxu0 %v679
    %885 = vmatpush.bf16.msra.mxu0 %v675
    %886 = vmatpush.bf16.msra.mxu0 %v671
    %887 = vmatpush.bf16.msra.mxu0 %v667
    %888 = vmatpush.bf16.msra.mxu0 %v663
    %889 = vmatmul.bf16.gmra.mxu0 %v85
    %v890 = vpop.f32.mrf.mxu0
    %v891 = vadd.f32 %v878, %v890
    %v892 = vpop.f32.mrf.mxu0
    %893 = vdwg.mxu0
    %894 = vmatpush.bf16.msra.mxu0 %v723
    %895 = vmatpush.bf16.msra.mxu0 %v719
    %896 = vmatpush.bf16.msra.mxu0 %v715
    %897 = vmatpush.bf16.msra.mxu0 %v711
    %898 = vmatpush.bf16.msra.mxu0 %v707
    %899 = vmatpush.bf16.msra.mxu0 %v703
    %900 = vmatpush.bf16.msra.mxu0 %v699
    %901 = vmatpush.bf16.msra.mxu0 %v695
    %902 = vmatmul.bf16.gmra.mxu0 %v86
    %v903 = vpop.f32.mrf.mxu0
    %v904 = vadd.f32 %v891, %v903
    %v905 = vpop.f32.mrf.mxu0
    %906 = vdwg.mxu0
    %907 = vmatpush.bf16.msra.mxu0 %v628
    %908 = vmatpush.bf16.msra.mxu0 %v624
    %909 = vmatpush.bf16.msra.mxu0 %v620
    %910 = vmatpush.bf16.msra.mxu0 %v616
    %911 = vmatpush.bf16.msra.mxu0 %v612
    %912 = vmatpush.bf16.msra.mxu0 %v608
    %913 = vmatpush.bf16.msra.mxu0 %v604
    %914 = vmatpush.bf16.msra.mxu0 %v600
    %915 = vmatmul.bf16.gmra.mxu0 %v83
    %v916 = vpop.f32.mrf.mxu0
    %v917 = vadd.f32 0.0, %v916
    %v918 = vpop.f32.mrf.mxu0
    %919 = vdwg.mxu0
    %920 = vmatpush.bf16.msra.mxu0 %v660
    %921 = vmatpush.bf16.msra.mxu0 %v656
    %922 = vmatpush.bf16.msra.mxu0 %v652
    %923 = vmatpush.bf16.msra.mxu0 %v648
    %924 = vmatpush.bf16.msra.mxu0 %v644
    %925 = vmatpush.bf16.msra.mxu0 %v640
    %926 = vmatpush.bf16.msra.mxu0 %v636
    %927 = vmatpush.bf16.msra.mxu0 %v632
    %928 = vmatmul.bf16.gmra.mxu0 %v84
    %v929 = vpop.f32.mrf.mxu0
    %v930 = vadd.f32 %v917, %v929
    %v931 = vpop.f32.mrf.mxu0
    %932 = vdwg.mxu0
    %933 = vmatpush.bf16.msra.mxu0 %v692
    %934 = vmatpush.bf16.msra.mxu0 %v688
    %935 = vmatpush.bf16.msra.mxu0 %v684
    %936 = vmatpush.bf16.msra.mxu0 %v680
    %937 = vmatpush.bf16.msra.mxu0 %v676
    %938 = vmatpush.bf16.msra.mxu0 %v672
    %939 = vmatpush.bf16.msra.mxu0 %v668
    %940 = vmatpush.bf16.msra.mxu0 %v664
    %941 = vmatmul.bf16.gmra.mxu0 %v85
    %v942 = vpop.f32.mrf.mxu0
    %v943 = vadd.f32 %v930, %v942
    %v944 = vpop.f32.mrf.mxu0
    %945 = vdwg.mxu0
    %946 = vmatpush.bf16.msra.mxu0 %v724
    %947 = vmatpush.bf16.msra.mxu0 %v720
    %948 = vmatpush.bf16.msra.mxu0 %v716
    %949 = vmatpush.bf16.msra.mxu0 %v712
    %950 = vmatpush.bf16.msra.mxu0 %v708
    %951 = vmatpush.bf16.msra.mxu0 %v704
    %952 = vmatpush.bf16.msra.mxu0 %v700
    %953 = vmatpush.bf16.msra.mxu0 %v696
    %954 = vmatmul.bf16.gmra.mxu0 %v86
    %v955 = vpop.f32.mrf.mxu0
    %v956 = vadd.f32 %v943, %v955
    %v957 = vpop.f32.mrf.mxu0
    %958 = vdwg.mxu0
    %959 = vmatpush.bf16.msra.mxu0 %v629
    %960 = vmatpush.bf16.msra.mxu0 %v625
    %961 = vmatpush.bf16.msra.mxu0 %v621
    %962 = vmatpush.bf16.msra.mxu0 %v617
    %963 = vmatpush.bf16.msra.mxu0 %v613
    %964 = vmatpush.bf16.msra.mxu0 %v609
    %965 = vmatpush.bf16.msra.mxu0 %v605
    %966 = vmatpush.bf16.msra.mxu0 %v601
    %967 = vmatmul.bf16.gmra.mxu0 %v83
    %v968 = vpop.f32.mrf.mxu0
    %v969 = vadd.f32 0.0, %v968
    %v970 = vpop.f32.mrf.mxu0
    %971 = vdwg.mxu0
    %972 = vmatpush.bf16.msra.mxu0 %v661
    %973 = vmatpush.bf16.msra.mxu0 %v657
    %974 = vmatpush.bf16.msra.mxu0 %v653
    %975 = vmatpush.bf16.msra.mxu0 %v649
    %976 = vmatpush.bf16.msra.mxu0 %v645
    %977 = vmatpush.bf16.msra.mxu0 %v641
    %978 = vmatpush.bf16.msra.mxu0 %v637
    %979 = vmatpush.bf16.msra.mxu0 %v633
    %980 = vmatmul.bf16.gmra.mxu0 %v84
    %v981 = vpop.f32.mrf.mxu0
    %v982 = vadd.f32 %v969, %v981
    %v983 = vpop.f32.mrf.mxu0
    %984 = vdwg.mxu0
    %985 = vmatpush.bf16.msra.mxu0 %v693
    %986 = vmatpush.bf16.msra.mxu0 %v689
    %987 = vmatpush.bf16.msra.mxu0 %v685
    %988 = vmatpush.bf16.msra.mxu0 %v681
    %989 = vmatpush.bf16.msra.mxu0 %v677
    %990 = vmatpush.bf16.msra.mxu0 %v673
    %991 = vmatpush.bf16.msra.mxu0 %v669
    %992 = vmatpush.bf16.msra.mxu0 %v665
    %993 = vmatmul.bf16.gmra.mxu0 %v85
    %v994 = vpop.f32.mrf.mxu0
    %v995 = vadd.f32 %v982, %v994
    %v996 = vpop.f32.mrf.mxu0
    %997 = vdwg.mxu0
    %998 = vmatpush.bf16.msra.mxu0 %v725
    %999 = vmatpush.bf16.msra.mxu0 %v721
    %1000 = vmatpush.bf16.msra.mxu0 %v717
    %1001 = vmatpush.bf16.msra.mxu0 %v713
    %1002 = vmatpush.bf16.msra.mxu0 %v709
    %1003 = vmatpush.bf16.msra.mxu0 %v705
    %1004 = vmatpush.bf16.msra.mxu0 %v701
    %1005 = vmatpush.bf16.msra.mxu0 %v697
    %1006 = vmatmul.bf16.gmra.mxu0 %v86
    %v1007 = vpop.f32.mrf.mxu0
    %v1008 = vadd.f32 %v995, %v1007
    %v1009 = vpop.f32.mrf.mxu0
    %1010 = vdwg.mxu0
    %1011 = vmatpush.bf16.msra.mxu0 %v630
    %1012 = vmatpush.bf16.msra.mxu0 %v626
    %1013 = vmatpush.bf16.msra.mxu0 %v622
    %1014 = vmatpush.bf16.msra.mxu0 %v618
    %1015 = vmatpush.bf16.msra.mxu0 %v614
    %1016 = vmatpush.bf16.msra.mxu0 %v610
    %1017 = vmatpush.bf16.msra.mxu0 %v606
    %1018 = vmatpush.bf16.msra.mxu0 %v602
    %1019 = vmatmul.bf16.gmra.mxu0 %v83
    %v1020 = vpop.f32.mrf.mxu0
    %v1021 = vadd.f32 0.0, %v1020
    %v1022 = vpop.f32.mrf.mxu0
    %1023 = vdwg.mxu0
    %1024 = vmatpush.bf16.msra.mxu0 %v662
    %1025 = vmatpush.bf16.msra.mxu0 %v658
    %1026 = vmatpush.bf16.msra.mxu0 %v654
    %1027 = vmatpush.bf16.msra.mxu0 %v650
    %1028 = vmatpush.bf16.msra.mxu0 %v646
    %1029 = vmatpush.bf16.msra.mxu0 %v642
    %1030 = vmatpush.bf16.msra.mxu0 %v638
    %1031 = vmatpush.bf16.msra.mxu0 %v634
    %1032 = vmatmul.bf16.gmra.mxu0 %v84
    %v1033 = vpop.f32.mrf.mxu0
    %v1034 = vadd.f32 %v1021, %v1033
    %v1035 = vpop.f32.mrf.mxu0
    %1036 = vdwg.mxu0
    %1037 = vmatpush.bf16.msra.mxu0 %v694
    %1038 = vmatpush.bf16.msra.mxu0 %v690
    %1039 = vmatpush.bf16.msra.mxu0 %v686
    %1040 = vmatpush.bf16.msra.mxu0 %v682
    %1041 = vmatpush.bf16.msra.mxu0 %v678
    %1042 = vmatpush.bf16.msra.mxu0 %v674
    %1043 = vmatpush.bf16.msra.mxu0 %v670
    %1044 = vmatpush.bf16.msra.mxu0 %v666
    %1045 = vmatmul.bf16.gmra.mxu0 %v85
    %v1046 = vpop.f32.mrf.mxu0
    %v1047 = vadd.f32 %v1034, %v1046
    %v1048 = vpop.f32.mrf.mxu0
    %1049 = vdwg.mxu0
    %1050 = vmatpush.bf16.msra.mxu0 %v726
    %1051 = vmatpush.bf16.msra.mxu0 %v722
    %1052 = vmatpush.bf16.msra.mxu0 %v718
    %1053 = vmatpush.bf16.msra.mxu0 %v714
    %1054 = vmatpush.bf16.msra.mxu0 %v710
    %1055 = vmatpush.bf16.msra.mxu0 %v706
    %1056 = vmatpush.bf16.msra.mxu0 %v702
    %1057 = vmatpush.bf16.msra.mxu0 %v698
    %1058 = vmatmul.bf16.gmra.mxu0 %v86
    %v1059 = vpop.f32.mrf.mxu0
    %v1060 = vadd.f32 %v1047, %v1059
    %v1061 = vpop.f32.mrf.mxu0
    %1062 = vdwg.mxu0
    %v1063 = vmax.f32 %v904, 0.0
    %v1064 = vmax.f32 %v956, 0.0
    %v1065 = vmax.f32 %v1008, 0.0
    %v1066 = vmax.f32 %v1060, 0.0
    %v1067 = vpack.c.bf16 %v1063, %v1063
    %v1068 = vpack.c.bf16 %v1064, %v1064
    %v1069 = vpack.c.bf16 %v1065, %v1065
    %v1070 = vpack.c.bf16 %v1066, %v1066
    %v1071 = vld [vmem:[#allocation7] sm:$0xff]
    %v1072 = vld [vmem:[#allocation7 + $0x8] sm:$0xff]
    %v1073 = vld [vmem:[#allocation7 + $0x10] sm:$0xff]
    %v1074 = vld [vmem:[#allocation7 + $0x18] sm:$0xff]
    %v1075 = vld [vmem:[#allocation7 + $0x20] sm:$0xff]
    %v1076 = vld [vmem:[#allocation7 + $0x28] sm:$0xff]
    %v1077 = vld [vmem:[#allocation7 + $0x30] sm:$0xff]
    %v1078 = vld [vmem:[#allocation7 + $0x38] sm:$0xff]
    %v1079 = vld [vmem:[#allocation7 + $0x40] sm:$0xff]
    %v1080 = vld [vmem:[#allocation7 + $0x48] sm:$0xff]
    %v1081 = vld [vmem:[#allocation7 + $0x50] sm:$0xff]
    %v1082 = vld [vmem:[#allocation7 + $0x58] sm:$0xff]
    %v1083 = vld [vmem:[#allocation7 + $0x60] sm:$0xff]
    %v1084 = vld [vmem:[#allocation7 + $0x68] sm:$0xff]
    %v1085 = vld [vmem:[#allocation7 + $0x70] sm:$0xff]
    %v1086 = vld [vmem:[#allocation7 + $0x78] sm:$0xff]
    %v1087 = vld [vmem:[#allocation7 + $0x80] sm:$0xff]
    %v1088 = vld [vmem:[#allocation7 + $0x88] sm:$0xff]
    %v1089 = vld [vmem:[#allocation7 + $0x90] sm:$0xff]
    %v1090 = vld [vmem:[#allocation7 + $0x98] sm:$0xff]
    %v1091 = vld [vmem:[#allocation7 + $0xa0] sm:$0xff]
    %v1092 = vld [vmem:[#allocation7 + $0xa8] sm:$0xff]
    %v1093 = vld [vmem:[#allocation7 + $0xb0] sm:$0xff]
    %v1094 = vld [vmem:[#allocation7 + $0xb8] sm:$0xff]
    %v1095 = vld [vmem:[#allocation7 + $0xc0] sm:$0xff]
    %v1096 = vld [vmem:[#allocation7 + $0xc8] sm:$0xff]
    %v1097 = vld [vmem:[#allocation7 + $0xd0] sm:$0xff]
    %v1098 = vld [vmem:[#allocation7 + $0xd8] sm:$0xff]
    %v1099 = vld [vmem:[#allocation7 + $0xe0] sm:$0xff]
    %v1100 = vld [vmem:[#allocation7 + $0xe8] sm:$0xff]
    %v1101 = vld [vmem:[#allocation7 + $0xf0] sm:$0xff]
    %v1102 = vld [vmem:[#allocation7 + $0xf8] sm:$0xff]
    %v1103 = vld [vmem:[#allocation7 + $0x100] sm:$0xff]
    %v1104 = vld [vmem:[#allocation7 + $0x108] sm:$0xff]
    %v1105 = vld [vmem:[#allocation7 + $0x110] sm:$0xff]
    %v1106 = vld [vmem:[#allocation7 + $0x118] sm:$0xff]
    %v1107 = vld [vmem:[#allocation7 + $0x120] sm:$0xff]
    %v1108 = vld [vmem:[#allocation7 + $0x128] sm:$0xff]
    %v1109 = vld [vmem:[#allocation7 + $0x130] sm:$0xff]
    %v1110 = vld [vmem:[#allocation7 + $0x138] sm:$0xff]
    %v1111 = vld [vmem:[#allocation7 + $0x140] sm:$0xff]
    %v1112 = vld [vmem:[#allocation7 + $0x148] sm:$0xff]
    %v1113 = vld [vmem:[#allocation7 + $0x150] sm:$0xff]
    %v1114 = vld [vmem:[#allocation7 + $0x158] sm:$0xff]
    %v1115 = vld [vmem:[#allocation7 + $0x160] sm:$0xff]
    %v1116 = vld [vmem:[#allocation7 + $0x168] sm:$0xff]
    %v1117 = vld [vmem:[#allocation7 + $0x170] sm:$0xff]
    %v1118 = vld [vmem:[#allocation7 + $0x178] sm:$0xff]
    %v1119 = vld [vmem:[#allocation7 + $0x180] sm:$0xff]
    %v1120 = vld [vmem:[#allocation7 + $0x188] sm:$0xff]
    %v1121 = vld [vmem:[#allocation7 + $0x190] sm:$0xff]
    %v1122 = vld [vmem:[#allocation7 + $0x198] sm:$0xff]
    %v1123 = vld [vmem:[#allocation7 + $0x1a0] sm:$0xff]
    %v1124 = vld [vmem:[#allocation7 + $0x1a8] sm:$0xff]
    %v1125 = vld [vmem:[#allocation7 + $0x1b0] sm:$0xff]
    %v1126 = vld [vmem:[#allocation7 + $0x1b8] sm:$0xff]
    %v1127 = vld [vmem:[#allocation7 + $0x1c0] sm:$0xff]
    %v1128 = vld [vmem:[#allocation7 + $0x1c8] sm:$0xff]
    %v1129 = vld [vmem:[#allocation7 + $0x1d0] sm:$0xff]
    %v1130 = vld [vmem:[#allocation7 + $0x1d8] sm:$0xff]
    %v1131 = vld [vmem:[#allocation7 + $0x1e0] sm:$0xff]
    %v1132 = vld [vmem:[#allocation7 + $0x1e8] sm:$0xff]
    %v1133 = vld [vmem:[#allocation7 + $0x1f0] sm:$0xff]
    %v1134 = vld [vmem:[#allocation7 + $0x1f8] sm:$0xff]
    %v1199 = vunpack.c.l.b16 %v1071
    %v1200 = vunpack.c.h.b16 %v1071
    %v1201 = vunpack.c.l.b16 %v1072
    %v1202 = vunpack.c.h.b16 %v1072
    %v1203 = vunpack.c.l.b16 %v1073
    %v1204 = vunpack.c.h.b16 %v1073
    %v1205 = vunpack.c.l.b16 %v1074
    %v1206 = vunpack.c.h.b16 %v1074
    %v1207 = vunpack.c.l.b16 %v1075
    %v1208 = vunpack.c.h.b16 %v1075
    %v1209 = vunpack.c.l.b16 %v1076
    %v1210 = vunpack.c.h.b16 %v1076
    %v1211 = vunpack.c.l.b16 %v1077
    %v1212 = vunpack.c.h.b16 %v1077
    %v1213 = vunpack.c.l.b16 %v1078
    %v1214 = vunpack.c.h.b16 %v1078
    %v1215 = vunpack.c.l.b16 %v1079
    %v1216 = vunpack.c.h.b16 %v1079
    %v1217 = vunpack.c.l.b16 %v1080
    %v1218 = vunpack.c.h.b16 %v1080
    %v1219 = vunpack.c.l.b16 %v1081
    %v1220 = vunpack.c.h.b16 %v1081
    %v1221 = vunpack.c.l.b16 %v1082
    %v1222 = vunpack.c.h.b16 %v1082
    %v1223 = vunpack.c.l.b16 %v1083
    %v1224 = vunpack.c.h.b16 %v1083
    %v1225 = vunpack.c.l.b16 %v1084
    %v1226 = vunpack.c.h.b16 %v1084
    %v1227 = vunpack.c.l.b16 %v1085
    %v1228 = vunpack.c.h.b16 %v1085
    %v1229 = vunpack.c.l.b16 %v1086
    %v1230 = vunpack.c.h.b16 %v1086
    %v1231 = vunpack.c.l.b16 %v1087
    %v1232 = vunpack.c.h.b16 %v1087
    %v1233 = vunpack.c.l.b16 %v1088
    %v1234 = vunpack.c.h.b16 %v1088
    %v1235 = vunpack.c.l.b16 %v1089
    %v1236 = vunpack.c.h.b16 %v1089
    %v1237 = vunpack.c.l.b16 %v1090
    %v1238 = vunpack.c.h.b16 %v1090
    %v1239 = vunpack.c.l.b16 %v1091
    %v1240 = vunpack.c.h.b16 %v1091
    %v1241 = vunpack.c.l.b16 %v1092
    %v1242 = vunpack.c.h.b16 %v1092
    %v1243 = vunpack.c.l.b16 %v1093
    %v1244 = vunpack.c.h.b16 %v1093
    %v1245 = vunpack.c.l.b16 %v1094
    %v1246 = vunpack.c.h.b16 %v1094
    %v1247 = vunpack.c.l.b16 %v1095
    %v1248 = vunpack.c.h.b16 %v1095
    %v1249 = vunpack.c.l.b16 %v1096
    %v1250 = vunpack.c.h.b16 %v1096
    %v1251 = vunpack.c.l.b16 %v1097
    %v1252 = vunpack.c.h.b16 %v1097
    %v1253 = vunpack.c.l.b16 %v1098
    %v1254 = vunpack.c.h.b16 %v1098
    %v1255 = vunpack.c.l.b16 %v1099
    %v1256 = vunpack.c.h.b16 %v1099
    %v1257 = vunpack.c.l.b16 %v1100
    %v1258 = vunpack.c.h.b16 %v1100
    %v1259 = vunpack.c.l.b16 %v1101
    %v1260 = vunpack.c.h.b16 %v1101
    %v1261 = vunpack.c.l.b16 %v1102
    %v1262 = vunpack.c.h.b16 %v1102
    %v1263 = vunpack.c.l.b16 %v1103
    %v1264 = vunpack.c.h.b16 %v1103
    %v1265 = vunpack.c.l.b16 %v1104
    %v1266 = vunpack.c.h.b16 %v1104
    %v1267 = vunpack.c.l.b16 %v1105
    %v1268 = vunpack.c.h.b16 %v1105
    %v1269 = vunpack.c.l.b16 %v1106
    %v1270 = vunpack.c.h.b16 %v1106
    %v1271 = vunpack.c.l.b16 %v1107
    %v1272 = vunpack.c.h.b16 %v1107
    %v1273 = vunpack.c.l.b16 %v1108
    %v1274 = vunpack.c.h.b16 %v1108
    %v1275 = vunpack.c.l.b16 %v1109
    %v1276 = vunpack.c.h.b16 %v1109
    %v1277 = vunpack.c.l.b16 %v1110
    %v1278 = vunpack.c.h.b16 %v1110
    %v1279 = vunpack.c.l.b16 %v1111
    %v1280 = vunpack.c.h.b16 %v1111
    %v1281 = vunpack.c.l.b16 %v1112
    %v1282 = vunpack.c.h.b16 %v1112
    %v1283 = vunpack.c.l.b16 %v1113
    %v1284 = vunpack.c.h.b16 %v1113
    %v1285 = vunpack.c.l.b16 %v1114
    %v1286 = vunpack.c.h.b16 %v1114
    %v1287 = vunpack.c.l.b16 %v1115
    %v1288 = vunpack.c.h.b16 %v1115
    %v1289 = vunpack.c.l.b16 %v1116
    %v1290 = vunpack.c.h.b16 %v1116
    %v1291 = vunpack.c.l.b16 %v1117
    %v1292 = vunpack.c.h.b16 %v1117
    %v1293 = vunpack.c.l.b16 %v1118
    %v1294 = vunpack.c.h.b16 %v1118
    %v1295 = vunpack.c.l.b16 %v1119
    %v1296 = vunpack.c.h.b16 %v1119
    %v1297 = vunpack.c.l.b16 %v1120
    %v1298 = vunpack.c.h.b16 %v1120
    %v1299 = vunpack.c.l.b16 %v1121
    %v1300 = vunpack.c.h.b16 %v1121
    %v1301 = vunpack.c.l.b16 %v1122
    %v1302 = vunpack.c.h.b16 %v1122
    %v1303 = vunpack.c.l.b16 %v1123
    %v1304 = vunpack.c.h.b16 %v1123
    %v1305 = vunpack.c.l.b16 %v1124
    %v1306 = vunpack.c.h.b16 %v1124
    %v1307 = vunpack.c.l.b16 %v1125
    %v1308 = vunpack.c.h.b16 %v1125
    %v1309 = vunpack.c.l.b16 %v1126
    %v1310 = vunpack.c.h.b16 %v1126
    %v1311 = vunpack.c.l.b16 %v1127
    %v1312 = vunpack.c.h.b16 %v1127
    %v1313 = vunpack.c.l.b16 %v1128
    %v1314 = vunpack.c.h.b16 %v1128
    %v1315 = vunpack.c.l.b16 %v1129
    %v1316 = vunpack.c.h.b16 %v1129
    %v1317 = vunpack.c.l.b16 %v1130
    %v1318 = vunpack.c.h.b16 %v1130
    %v1319 = vunpack.c.l.b16 %v1131
    %v1320 = vunpack.c.h.b16 %v1131
    %v1321 = vunpack.c.l.b16 %v1132
    %v1322 = vunpack.c.h.b16 %v1132
    %v1323 = vunpack.c.l.b16 %v1133
    %v1324 = vunpack.c.h.b16 %v1133
    %v1325 = vunpack.c.l.b16 %v1134
    %v1326 = vunpack.c.h.b16 %v1134
    %v1327 = vpack.c.b16 %v1201, %v1199
    %v1328 = vpack.c.b16 %v1202, %v1200
    %v1329 = vpack.c.b16 %v1205, %v1203
    %v1330 = vpack.c.b16 %v1206, %v1204
    %v1331 = vpack.c.b16 %v1209, %v1207
    %v1332 = vpack.c.b16 %v1210, %v1208
    %v1333 = vpack.c.b16 %v1213, %v1211
    %v1334 = vpack.c.b16 %v1214, %v1212
    %v1335 = vpack.c.b16 %v1217, %v1215
    %v1336 = vpack.c.b16 %v1218, %v1216
    %v1337 = vpack.c.b16 %v1221, %v1219
    %v1338 = vpack.c.b16 %v1222, %v1220
    %v1339 = vpack.c.b16 %v1225, %v1223
    %v1340 = vpack.c.b16 %v1226, %v1224
    %v1341 = vpack.c.b16 %v1229, %v1227
    %v1342 = vpack.c.b16 %v1230, %v1228
    %v1343 = vpack.c.b16 %v1233, %v1231
    %v1344 = vpack.c.b16 %v1234, %v1232
    %v1345 = vpack.c.b16 %v1237, %v1235
    %v1346 = vpack.c.b16 %v1238, %v1236
    %v1347 = vpack.c.b16 %v1241, %v1239
    %v1348 = vpack.c.b16 %v1242, %v1240
    %v1349 = vpack.c.b16 %v1245, %v1243
    %v1350 = vpack.c.b16 %v1246, %v1244
    %v1351 = vpack.c.b16 %v1249, %v1247
    %v1352 = vpack.c.b16 %v1250, %v1248
    %v1353 = vpack.c.b16 %v1253, %v1251
    %v1354 = vpack.c.b16 %v1254, %v1252
    %v1355 = vpack.c.b16 %v1257, %v1255
    %v1356 = vpack.c.b16 %v1258, %v1256
    %v1357 = vpack.c.b16 %v1261, %v1259
    %v1358 = vpack.c.b16 %v1262, %v1260
    %v1359 = vpack.c.b16 %v1265, %v1263
    %v1360 = vpack.c.b16 %v1266, %v1264
    %v1361 = vpack.c.b16 %v1269, %v1267
    %v1362 = vpack.c.b16 %v1270, %v1268
    %v1363 = vpack.c.b16 %v1273, %v1271
    %v1364 = vpack.c.b16 %v1274, %v1272
    %v1365 = vpack.c.b16 %v1277, %v1275
    %v1366 = vpack.c.b16 %v1278, %v1276
    %v1367 = vpack.c.b16 %v1281, %v1279
    %v1368 = vpack.c.b16 %v1282, %v1280
    %v1369 = vpack.c.b16 %v1285, %v1283
    %v1370 = vpack.c.b16 %v1286, %v1284
    %v1371 = vpack.c.b16 %v1289, %v1287
    %v1372 = vpack.c.b16 %v1290, %v1288
    %v1373 = vpack.c.b16 %v1293, %v1291
    %v1374 = vpack.c.b16 %v1294, %v1292
    %v1375 = vpack.c.b16 %v1297, %v1295
    %v1376 = vpack.c.b16 %v1298, %v1296
    %v1377 = vpack.c.b16 %v1301, %v1299
    %v1378 = vpack.c.b16 %v1302, %v1300
    %v1379 = vpack.c.b16 %v1305, %v1303
    %v1380 = vpack.c.b16 %v1306, %v1304
    %v1381 = vpack.c.b16 %v1309, %v1307
    %v1382 = vpack.c.b16 %v1310, %v1308
    %v1383 = vpack.c.b16 %v1313, %v1311
    %v1384 = vpack.c.b16 %v1314, %v1312
    %v1385 = vpack.c.b16 %v1317, %v1315
    %v1386 = vpack.c.b16 %v1318, %v1316
    %v1387 = vpack.c.b16 %v1321, %v1319
    %v1388 = vpack.c.b16 %v1322, %v1320
    %v1389 = vpack.c.b16 %v1325, %v1323
    %v1390 = vpack.c.b16 %v1326, %v1324
    %1455 = vmatpush.bf16.msra.mxu0 %v1341
    %1456 = vmatpush.bf16.msra.mxu0 %v1339
    %1457 = vmatpush.bf16.msra.mxu0 %v1337
    %1458 = vmatpush.bf16.msra.mxu0 %v1335
    %1459 = vmatpush.bf16.msra.mxu0 %v1333
    %1460 = vmatpush.bf16.msra.mxu0 %v1331
    %1461 = vmatpush.bf16.msra.mxu0 %v1329
    %1462 = vmatpush.bf16.msra.mxu0 %v1327
    %1463 = vmatmul.bf16.gmra.mxu0 %v1067
    %v1464 = vpop.f32.mrf.mxu0
    %v1465 = vadd.f32 0.0, %v1464
    %v1466 = vpop.f32.mrf.mxu0
    %1467 = vdwg.mxu0
    %1468 = vmatpush.bf16.msra.mxu0 %v1357
    %1469 = vmatpush.bf16.msra.mxu0 %v1355
    %1470 = vmatpush.bf16.msra.mxu0 %v1353
    %1471 = vmatpush.bf16.msra.mxu0 %v1351
    %1472 = vmatpush.bf16.msra.mxu0 %v1349
    %1473 = vmatpush.bf16.msra.mxu0 %v1347
    %1474 = vmatpush.bf16.msra.mxu0 %v1345
    %1475 = vmatpush.bf16.msra.mxu0 %v1343
    %1476 = vmatmul.bf16.gmra.mxu0 %v1068
    %v1477 = vpop.f32.mrf.mxu0
    %v1478 = vadd.f32 %v1465, %v1477
    %v1479 = vpop.f32.mrf.mxu0
    %1480 = vdwg.mxu0
    %1481 = vmatpush.bf16.msra.mxu0 %v1373
    %1482 = vmatpush.bf16.msra.mxu0 %v1371
    %1483 = vmatpush.bf16.msra.mxu0 %v1369
    %1484 = vmatpush.bf16.msra.mxu0 %v1367
    %1485 = vmatpush.bf16.msra.mxu0 %v1365
    %1486 = vmatpush.bf16.msra.mxu0 %v1363
    %1487 = vmatpush.bf16.msra.mxu0 %v1361
    %1488 = vmatpush.bf16.msra.mxu0 %v1359
    %1489 = vmatmul.bf16.gmra.mxu0 %v1069
    %v1490 = vpop.f32.mrf.mxu0
    %v1491 = vadd.f32 %v1478, %v1490
    %v1492 = vpop.f32.mrf.mxu0
    %1493 = vdwg.mxu0
    %1494 = vmatpush.bf16.msra.mxu0 %v1389
    %1495 = vmatpush.bf16.msra.mxu0 %v1387
    %1496 = vmatpush.bf16.msra.mxu0 %v1385
    %1497 = vmatpush.bf16.msra.mxu0 %v1383
    %1498 = vmatpush.bf16.msra.mxu0 %v1381
    %1499 = vmatpush.bf16.msra.mxu0 %v1379
    %1500 = vmatpush.bf16.msra.mxu0 %v1377
    %1501 = vmatpush.bf16.msra.mxu0 %v1375
    %1502 = vmatmul.bf16.gmra.mxu0 %v1070
    %v1503 = vpop.f32.mrf.mxu0
    %v1504 = vadd.f32 %v1491, %v1503
    %v1505 = vpop.f32.mrf.mxu0
    %1506 = vdwg.mxu0
    %1507 = vmatpush.bf16.msra.mxu0 %v1342
    %1508 = vmatpush.bf16.msra.mxu0 %v1340
    %1509 = vmatpush.bf16.msra.mxu0 %v1338
    %1510 = vmatpush.bf16.msra.mxu0 %v1336
    %1511 = vmatpush.bf16.msra.mxu0 %v1334
    %1512 = vmatpush.bf16.msra.mxu0 %v1332
    %1513 = vmatpush.bf16.msra.mxu0 %v1330
    %1514 = vmatpush.bf16.msra.mxu0 %v1328
    %1515 = vmatmul.bf16.gmra.mxu0 %v1067
    %v1516 = vpop.f32.mrf.mxu0
    %v1517 = vadd.f32 0.0, %v1516
    %v1518 = vpop.f32.mrf.mxu0
    %1519 = vdwg.mxu0
    %1520 = vmatpush.bf16.msra.mxu0 %v1358
    %1521 = vmatpush.bf16.msra.mxu0 %v1356
    %1522 = vmatpush.bf16.msra.mxu0 %v1354
    %1523 = vmatpush.bf16.msra.mxu0 %v1352
    %1524 = vmatpush.bf16.msra.mxu0 %v1350
    %1525 = vmatpush.bf16.msra.mxu0 %v1348
    %1526 = vmatpush.bf16.msra.mxu0 %v1346
    %1527 = vmatpush.bf16.msra.mxu0 %v1344
    %1528 = vmatmul.bf16.gmra.mxu0 %v1068
    %v1529 = vpop.f32.mrf.mxu0
    %v1530 = vadd.f32 %v1517, %v1529
    %v1531 = vpop.f32.mrf.mxu0
    %1532 = vdwg.mxu0
    %1533 = vmatpush.bf16.msra.mxu0 %v1374
    %1534 = vmatpush.bf16.msra.mxu0 %v1372
    %1535 = vmatpush.bf16.msra.mxu0 %v1370
    %1536 = vmatpush.bf16.msra.mxu0 %v1368
    %1537 = vmatpush.bf16.msra.mxu0 %v1366
    %1538 = vmatpush.bf16.msra.mxu0 %v1364
    %1539 = vmatpush.bf16.msra.mxu0 %v1362
    %1540 = vmatpush.bf16.msra.mxu0 %v1360
    %1541 = vmatmul.bf16.gmra.mxu0 %v1069
    %v1542 = vpop.f32.mrf.mxu0
    %v1543 = vadd.f32 %v1530, %v1542
    %v1544 = vpop.f32.mrf.mxu0
    %1545 = vdwg.mxu0
    %1546 = vmatpush.bf16.msra.mxu0 %v1390
    %1547 = vmatpush.bf16.msra.mxu0 %v1388
    %1548 = vmatpush.bf16.msra.mxu0 %v1386
    %1549 = vmatpush.bf16.msra.mxu0 %v1384
    %1550 = vmatpush.bf16.msra.mxu0 %v1382
    %1551 = vmatpush.bf16.msra.mxu0 %v1380
    %1552 = vmatpush.bf16.msra.mxu0 %v1378
    %1553 = vmatpush.bf16.msra.mxu0 %v1376
    %1554 = vmatmul.bf16.gmra.mxu0 %v1070
    %v1555 = vpop.f32.mrf.mxu0
    %v1556 = vadd.f32 %v1543, %v1555
    %v1557 = vpop.f32.mrf.mxu0
    %1558 = vdwg.mxu0
    %v1559 = vmax.f32 %v1504, 0.0
    %v1560 = vmax.f32 %v1556, 0.0
    %v1561 = vpack.c.bf16 %v1559, %v1559
    %v1562 = vpack.c.bf16 %v1560, %v1560
    %v1563 = vld [vmem:[#allocation8] sm:$0xf]
    %v1564 = vld [vmem:[#allocation8 + $0x4] sm:$0xf]
    %v1565 = vld [vmem:[#allocation8 + $0x8] sm:$0xf]
    %v1566 = vld [vmem:[#allocation8 + $0xc] sm:$0xf]
    %v1567 = vld [vmem:[#allocation8 + $0x10] sm:$0xf]
    %v1568 = vld [vmem:[#allocation8 + $0x14] sm:$0xf]
    %v1569 = vld [vmem:[#allocation8 + $0x18] sm:$0xf]
    %v1570 = vld [vmem:[#allocation8 + $0x1c] sm:$0xf]
    %v1571 = vld [vmem:[#allocation8 + $0x20] sm:$0xf]
    %v1572 = vld [vmem:[#allocation8 + $0x24] sm:$0xf]
    %v1573 = vld [vmem:[#allocation8 + $0x28] sm:$0xf]
    %v1574 = vld [vmem:[#allocation8 + $0x2c] sm:$0xf]
    %v1575 = vld [vmem:[#allocation8 + $0x30] sm:$0xf]
    %v1576 = vld [vmem:[#allocation8 + $0x34] sm:$0xf]
    %v1577 = vld [vmem:[#allocation8 + $0x38] sm:$0xf]
    %v1578 = vld [vmem:[#allocation8 + $0x3c] sm:$0xf]
    %v1579 = vld [vmem:[#allocation8 + $0x40] sm:$0xf]
    %v1580 = vld [vmem:[#allocation8 + $0x44] sm:$0xf]
    %v1581 = vld [vmem:[#allocation8 + $0x48] sm:$0xf]
    %v1582 = vld [vmem:[#allocation8 + $0x4c] sm:$0xf]
    %v1583 = vld [vmem:[#allocation8 + $0x50] sm:$0xf]
    %v1584 = vld [vmem:[#allocation8 + $0x54] sm:$0xf]
    %v1585 = vld [vmem:[#allocation8 + $0x58] sm:$0xf]
    %v1586 = vld [vmem:[#allocation8 + $0x5c] sm:$0xf]
    %v1587 = vld [vmem:[#allocation8 + $0x60] sm:$0xf]
    %v1588 = vld [vmem:[#allocation8 + $0x64] sm:$0xf]
    %v1589 = vld [vmem:[#allocation8 + $0x68] sm:$0xf]
    %v1590 = vld [vmem:[#allocation8 + $0x6c] sm:$0xf]
    %v1591 = vld [vmem:[#allocation8 + $0x70] sm:$0xf]
    %v1592 = vld [vmem:[#allocation8 + $0x74] sm:$0xf]
    %v1593 = vld [vmem:[#allocation8 + $0x78] sm:$0xf]
    %v1594 = vld [vmem:[#allocation8 + $0x7c] sm:$0xf]
    %v1627 = vunpack.c.l.b16 %v1563
    %v1628 = vunpack.c.l.b16 %v1564
    %v1629 = vunpack.c.l.b16 %v1565
    %v1630 = vunpack.c.l.b16 %v1566
    %v1631 = vunpack.c.l.b16 %v1567
    %v1632 = vunpack.c.l.b16 %v1568
    %v1633 = vunpack.c.l.b16 %v1569
    %v1634 = vunpack.c.l.b16 %v1570
    %v1635 = vunpack.c.l.b16 %v1571
    %v1636 = vunpack.c.l.b16 %v1572
    %v1637 = vunpack.c.l.b16 %v1573
    %v1638 = vunpack.c.l.b16 %v1574
    %v1639 = vunpack.c.l.b16 %v1575
    %v1640 = vunpack.c.l.b16 %v1576
    %v1641 = vunpack.c.l.b16 %v1577
    %v1642 = vunpack.c.l.b16 %v1578
    %v1643 = vunpack.c.l.b16 %v1579
    %v1644 = vunpack.c.l.b16 %v1580
    %v1645 = vunpack.c.l.b16 %v1581
    %v1646 = vunpack.c.l.b16 %v1582
    %v1647 = vunpack.c.l.b16 %v1583
    %v1648 = vunpack.c.l.b16 %v1584
    %v1649 = vunpack.c.l.b16 %v1585
    %v1650 = vunpack.c.l.b16 %v1586
    %v1651 = vunpack.c.l.b16 %v1587
    %v1652 = vunpack.c.l.b16 %v1588
    %v1653 = vunpack.c.l.b16 %v1589
    %v1654 = vunpack.c.l.b16 %v1590
    %v1655 = vunpack.c.l.b16 %v1591
    %v1656 = vunpack.c.l.b16 %v1592
    %v1657 = vunpack.c.l.b16 %v1593
    %v1658 = vunpack.c.l.b16 %v1594
    %v1659 = vpack.c.b16 %v1628, %v1627
    %v1660 = vpack.c.b16 %v1630, %v1629
    %v1661 = vpack.c.b16 %v1632, %v1631
    %v1662 = vpack.c.b16 %v1634, %v1633
    %v1663 = vpack.c.b16 %v1636, %v1635
    %v1664 = vpack.c.b16 %v1638, %v1637
    %v1665 = vpack.c.b16 %v1640, %v1639
    %v1666 = vpack.c.b16 %v1642, %v1641
    %v1667 = vpack.c.b16 %v1644, %v1643
    %v1668 = vpack.c.b16 %v1646, %v1645
    %v1669 = vpack.c.b16 %v1648, %v1647
    %v1670 = vpack.c.b16 %v1650, %v1649
    %v1671 = vpack.c.b16 %v1652, %v1651
    %v1672 = vpack.c.b16 %v1654, %v1653
    %v1673 = vpack.c.b16 %v1656, %v1655
    %v1674 = vpack.c.b16 %v1658, %v1657
    %1691 = vmatpush.bf16.msra.mxu0 %v1666
    %1692 = vmatpush.bf16.msra.mxu0 %v1665
    %1693 = vmatpush.bf16.msra.mxu0 %v1664
    %1694 = vmatpush.bf16.msra.mxu0 %v1663
    %1695 = vmatpush.bf16.msra.mxu0 %v1662
    %1696 = vmatpush.bf16.msra.mxu0 %v1661
    %1697 = vmatpush.bf16.msra.mxu0 %v1660
    %1698 = vmatpush.bf16.msra.mxu0 %v1659
    %1699 = vmatmul.bf16.gmra.mxu0 %v1561
    %v1700 = vpop.f32.mrf.mxu0
    %v1701 = vadd.f32 0.0, %v1700
    %v1702 = vpop.f32.mrf.mxu0
    %1703 = vdwg.mxu0
    %1704 = vmatpush.bf16.msra.mxu0 %v1674
    %1705 = vmatpush.bf16.msra.mxu0 %v1673
    %1706 = vmatpush.bf16.msra.mxu0 %v1672
    %1707 = vmatpush.bf16.msra.mxu0 %v1671
    %1708 = vmatpush.bf16.msra.mxu0 %v1670
    %1709 = vmatpush.bf16.msra.mxu0 %v1669
    %1710 = vmatpush.bf16.msra.mxu0 %v1668
    %1711 = vmatpush.bf16.msra.mxu0 %v1667
    %1712 = vmatmul.bf16.gmra.mxu0 %v1562
    %v1713 = vpop.f32.mrf.mxu0
    %v1714 = vadd.f32 %v1701, %v1713
    %v1715 = vpop.f32.mrf.mxu0
    %1716 = vdwg.mxu0
    %1717 = vst [vmem:[#allocation10] sm:$0xff] %v1714
    // Predicated region
    $region34: #{age_branch.1} parent=1 // pred_check
      _
    $region35: #{age_branch.1} parent=1 // pred_check_branch
      %1719 = sbr.rel (0) target = $region37
    $region36: #{age_branch.1} parent=1 // pred_region
      %1721 = vsyncadd [#allocation4], 0
      %s1723 = sshll.u32 [#allocation10], 4
      %s1724 = int_to_ptr.vmem [resolvable:$true] %s1723
      %s1725 = sshll.u32 %s4, 4
      %s1726 = int_to_ptr.hbm [resolvable:$true] %s1725
      %1728 = dma.vmem_to_hbm [thread:$0]  %s1724, 128, %s1726, [#allocation4]
    $region37: #{age_branch.1} parent=1 // pred_fallthru
      _
    // Predicated region
    $region38: #{age_branch.1} parent=1 // pred_check
      _
    $region39: #{age_branch.1} parent=1 // pred_check_branch
      %1730 = sbr.rel (0) target = $region41
    $region40: #{age_branch.1} parent=1 // pred_region
      %1732 = dma.done [#allocation4], 128
    $region41: #{age_branch.1} parent=1 // pred_fallthru
      _
    %1733 = vsyncpa [#allocation3], 1
    %1734 = vsyncpa [#allocation6], 1
    %1735 = vsyncpa [#allocation9], 1
    %1736 = vsyncpa [#allocation4], 1

</llo_original>
